<compile_context>
chip_gen: v7x
topology: tpu7x:2x2x1
jax: 0.10.0
libtpu: 0.0.40
codegen_flags: <defaults>
</compile_context>

<pallas_src>
import functools
import math

import jax
import jax.numpy as jnp
import numpy as np
from jax.experimental import pallas as pl
from jax.experimental.pallas import tpu as pltpu
from jax.scipy.special import erf as _erf_exact

EPS = 1e-5  # nn.LayerNorm default


# ----------------------------- math helpers -----------------------------
def _erf_poly(z):
    # Abramowitz & Stegun 7.1.26, |err| < 1.5e-7 -> erf-exact GELU at fp32 precision.
    # TODO(synk): jax.lax.erf has no reliable Mosaic lowering; this polynomial keeps nn.GELU()'s
    # exact (erf) semantics in-kernel.  The single exp lands on the EUP slot.
    a1, a2, a3, a4, a5 = 0.254829592, -0.284496736, 1.421413741, -1.453152027, 1.061405429
    p = 0.3275911
    sgn = jnp.where(z >= 0.0, 1.0, -1.0)
    az = jnp.abs(z)
    t = 1.0 / (1.0 + p * az)
    poly = ((((a5 * t + a4) * t + a3) * t + a2) * t + a1) * t
    return sgn * (1.0 - poly * jnp.exp(-az * az))


def _gelu_kernel(x):        # in-kernel GELU (polynomial erf)
    return 0.5 * x * (1.0 + _erf_poly(x * (1.0 / math.sqrt(2.0))))


def _gelu_reference(x):     # reference GELU (exact erf), used OUTSIDE the kernel only
    return 0.5 * x * (1.0 + _erf_exact(x * (1.0 / math.sqrt(2.0))))


def _layernorm(v, gamma, beta):
    mu = jnp.mean(v, axis=-1, keepdims=True)
    var = jnp.mean((v - mu) ** 2, axis=-1, keepdims=True)   # biased variance, like torch
    return (v - mu) * jax.lax.rsqrt(var + EPS) * gamma + beta


# ----------------------------- the single fused Pallas kernel -----------------------------
# Packed parameter layout (rows of prm_ref, width F = num_heads*dim*ws*ws lanes):
#   [0          : nh*K     )  Whead -- per-head window-conv weights with the WindowAttention
#                                      view/permute/broadcast folded in (nh blocks of (K, F))
#   [nh*K       : nh*K+nh  )  bhead -- per-head conv bias, already scattered to the F lanes
#   [..         : .. + F   )  W1    -- MLP 1x1 conv #1 weight (F, hid), lanes >= hid are 0
#   [..         : .. + hid )  W2    -- MLP 1x1 conv #2 weight (hid, F)
#   last 6 rows                g1, b1, bm1, bm2, g2, b2
def _stb_fused_kernel(x_ref, prm_ref, out_ref, *, B, nh, K, hid):
    _, F = out_ref.shape
    r_wh = 0
    r_bh = nh * K
    r_w1 = r_bh + nh
    r_w2 = r_w1 + F
    r_vec = r_w2 + hid

    xrow = x_ref[...]                 # (1, F): x flattened; x[b, k] == xrow[0, b*K + k] (B == nh)
    w_rows = [prm_ref[r_wh + i:r_wh + i + 1, :] for i in range(nh * K)]
    b_rows = [prm_ref[r_bh + h:r_bh + h + 1, :] for h in range(nh)]
    g1 = prm_ref[r_vec + 0:r_vec + 1, :]
    b1 = prm_ref[r_vec + 1:r_vec + 2, :]
    bm1 = prm_ref[r_vec + 2:r_vec + 3, :]
    bm2 = prm_ref[r_vec + 3:r_vec + 4, :]
    g2 = prm_ref[r_vec + 4:r_vec + 5, :]
    b2 = prm_ref[r_vec + 5:r_vec + 6, :]

    # ---- WindowAttention conv (+ folded view/permute/broadcast + conv bias) + residual #1 ----
    # Row p = b*nh + h of s is   x_flat + conv_bias[head h] + sum_k x[b, k] * Whead[h][k, :],
    # built with unrolled rank-1 updates on (1, F) rows (trace-time Python loops, pure VALU).
    rows = []
    for b in range(B):
        for h in range(nh):
            acc = xrow + b_rows[h]
            for k in range(K):
                acc = acc + xrow[:, b * K + k:b * K + k + 1] * w_rows[h * K + k]
            rows.append(acc)
    s = jnp.concatenate(rows, axis=0)                     # (P, F), P = B*nh

    n1 = _layernorm(s, g1, b1)                            # norm1

    # ---- MLP: 1x1 conv #1 -> exact GELU -> 1x1 conv #2, unrolled 2-D rank-1 updates ----
    h1 = bm1                                              # hidden channels live in lanes [:hid]
    for k in range(F):
        h1 = h1 + n1[:, k:k + 1] * prm_ref[r_w1 + k:r_w1 + k + 1, :]
    g = _gelu_kernel(h1)                                  # lanes >= hid are never read below
    m = bm2
    for k in range(hid):
        m = m + g[:, k:k + 1] * prm_ref[r_w2 + k:r_w2 + k + 1, :]

    out_ref[...] = _layernorm(n1 + m, g2, b2)             # residual #2 + norm2


# ----------------------------- parameters -----------------------------
def init_params(key, dim, num_heads, window_size):
    nh, ws = num_heads, window_size
    ks = jax.random.split(key, 6)

    def u(k, shape, fan_in):
        bound = 1.0 / math.sqrt(fan_in)
        return jax.random.uniform(k, shape, jnp.float32, -bound, bound)

    return {
        "conv_w": u(ks[0], (2 * dim, dim, ws, ws), dim * ws * ws),   # WindowAttention.conv
        "conv_b": u(ks[1], (2 * dim,), dim * ws * ws),
        "norm1_w": jnp.ones((nh, dim, ws, ws), jnp.float32),
        "norm1_b": jnp.zeros((nh, dim, ws, ws), jnp.float32),
        "mlp_w1": u(ks[2], (dim, dim * nh, 1, 1), dim * nh),         # Conv2d(dim*nh, dim, 1)
        "mlp_b1": u(ks[3], (dim,), dim * nh),
        "mlp_w2": u(ks[4], (2 * dim, dim, 1, 1), dim),               # Conv2d(dim, 2*dim, 1)
        "mlp_b2": u(ks[5], (2 * dim,), dim),
        "norm2_w": jnp.ones((nh, dim, ws, ws), jnp.float32),
        "norm2_b": jnp.zeros((nh, dim, ws, ws), jnp.float32),
    }


def prepare_params(p, *, dim, num_heads, window_size):
    """Fold + pack the 10 STB parameter tensors into one (R, F) f32 block.

    Runs ONCE per parameter set (hoisted out of the per-step path).  Three repairs of the
    original forward are baked into the folding (exactly as in the jnp reference):
      (1) the non-contiguous .view in WindowAttention behaves as reshape,
      (2) nn.Conv2d cannot take the 5-D normed tensor, so the (num_heads, dim) LayerNorm axes
          are flattened into its in_channels,
      (3) `x + mlp_output` identifies the 2*dim MLP output channels with those same axes.
    """
    nh, ws = num_heads, window_size
    K = dim * ws * ws
    F = nh * dim * ws * ws
    hid = dim
    d_ = dim // (nh * ws * ws)
    f32 = jnp.float32

    # conv output channel feeding output position f on head h (ws == 1, d_ == 1 family)
    t_of_f = (np.arange(F) // (ws * ws)) % dim
    c_hf = t_of_f[None, :] * (nh * d_) + np.arange(nh)[:, None] * d_       # (nh, F)

    Wc2 = p["conv_w"].reshape(2 * dim, K).astype(f32)
    bc = p["conv_b"].astype(f32)
    Whead = jnp.transpose(Wc2[c_hf, :], (0, 2, 1)).reshape(nh * K, F)      # (nh*K, F)
    bhead = bc[c_hf]                                                       # (nh, F)

    W1 = p["mlp_w1"].reshape(hid, dim * nh).T.astype(f32)                  # (F, hid)
    W1p = jnp.zeros((F, F), f32).at[:, :hid].set(W1)                       # lanes >= hid unused
    bm1 = jnp.zeros((1, F), f32).at[:, :hid].set(p["mlp_b1"][None, :].astype(f32))
    W2 = p["mlp_w2"].reshape(2 * dim, hid).T.astype(f32)                   # (hid, F)
    bm2 = p["mlp_b2"].reshape(1, F).astype(f32)

    g1 = p["norm1_w"].reshape(1, F).astype(f32)
    b1 = p["norm1_b"].reshape(1, F).astype(f32)
    g2 = p["norm2_w"].reshape(1, F).astype(f32)
    b2 = p["norm2_b"].reshape(1, F).astype(f32)

    # (rows, F) with F on lanes: every in-kernel slice is an aligned lane-0 broadcast row.
    return jnp.concatenate([Whead, bhead, W1p, W2, g1, b1, bm1, bm2, g2, b2], axis=0)


# ----------------------------- forward (single fused Pallas call) -----------------------------
def stb_forward(x, prm, *, dim, num_heads, window_size):
    """Per-step forward: two free reshapes around one fused pallas_call."""
    B, C, H, W = x.shape
    nh, ws = num_heads, window_size
    K = dim * ws * ws
    F = nh * dim * ws * ws
    P = B * nh
    hid = dim

    assert C == dim and H == ws and W == ws, \
        "LayerNorm([nh, dim, ws, ws]) in STB forces spatial extent == window_size"
    assert dim % (nh * ws * ws) == 0, \
        "WindowAttention channel split requires dim % (num_heads*window_size**2) == 0"
    d_ = dim // (nh * ws * ws)
    assert d_ == 1 and dim == 2 and B == nh and 2 * dim == F, \
        "the original forward is only shape-consistent for dim=2, num_heads=2, ws=1, B=2"

    xrow = x.reshape(1, F).astype(jnp.float32)   # pure metadata (bitcast): no wrapper compute

    kernel = functools.partial(_stb_fused_kernel, B=B, nh=nh, K=K, hid=hid)
    out2d = pl.pallas_call(
        kernel,
        out_shape=jax.ShapeDtypeStruct((P, F), jnp.float32),
        # No grid: the whole problem is one tiny resident VMEM block -> nothing to pipeline,
        # no double-buffering of the invariant parameter pack.
        in_specs=[
            pl.BlockSpec(memory_space=pltpu.MemorySpace.VMEM),   # x, flattened to (1, F)
            pl.BlockSpec(memory_space=pltpu.MemorySpace.VMEM),   # packed params (R, F)
        ],
        out_specs=pl.BlockSpec(memory_space=pltpu.MemorySpace.VMEM),
        # Advisory: tell XLA's scheduler this custom call is tiny.
        cost_estimate=pl.CostEstimate(flops=600, transcendentals=24, bytes_accessed=384),
    )(xrow, prm)

    return out2d.reshape(P, nh, dim, ws, ws)                     # (B*nh, nh, dim, ws, ws)


# ----------------------------- pure-jnp reference (mirrors the torch ops) -----------------------------
def stb_reference(x, p, *, dim, num_heads, window_size):
    B, C, H, W = x.shape
    nh, ws = num_heads, window_size
    xcol = x.reshape(B, dim * ws * ws)
    y = xcol @ p["conv_w"].reshape(2 * dim, -1).T + p["conv_b"]
    y = y.reshape(B, 2 * dim, H // ws, W // ws)
    a = y.reshape(B, 2, nh, -1, H, W)
    a = jnp.transpose(a, (0, 2, 1, 3, 4, 5))
    a = a.reshape(B * nh, 2, -1, H, W)
    attn = jnp.transpose(a, (0, 2, 1, 3, 4))
    s = x + attn
    P, F = s.shape[0], int(s[0].size)
    s2 = s.reshape(P, F)
    n1 = _layernorm(s2, p["norm1_w"].reshape(1, F), p["norm1_b"].reshape(1, F))
    h = n1 @ p["mlp_w1"].reshape(dim, dim * nh).T + p["mlp_b1"]
    g = _gelu_reference(h)                                       # exact erf GELU (torch semantics)
    m = g @ p["mlp_w2"].reshape(2 * dim, dim).T + p["mlp_b2"]
    t = n1 + m
    out = _layernorm(t, p["norm2_w"].reshape(1, F), p["norm2_b"].reshape(1, F))
    return out.reshape(s.shape)


# ----------------------------- main -----------------------------
if __name__ == "__main__":
    # The only shape family for which the original PyTorch forward is shape-consistent.
    dim, num_heads, window_size, B = 2, 2, 1, 2

    key = jax.random.PRNGKey(0)
    k_x, k_p = jax.random.split(key)
    params = init_params(k_p, dim, num_heads, window_size)
    x = jax.random.normal(k_x, (B, dim, window_size, window_size), jnp.float32)

    # Parameter folding/packing is hoisted out of the per-step path: done once, up front.
    prm = jax.block_until_ready(
        prepare_params(params, dim=dim, num_heads=num_heads, window_size=window_size))

    fwd = jax.jit(functools.partial(stb_forward, dim=dim, num_heads=num_heads,
                                    window_size=window_size))
    out = jax.block_until_ready(fwd(x, prm))

    ref = stb_reference(x, params, dim=dim, num_heads=num_heads, window_size=window_size)
    assert out.shape == (B * num_heads, num_heads, dim, window_size, window_size), out.shape
    assert jnp.allclose(out, ref, atol=1e-3, rtol=1e-3), "Pallas result mismatch vs reference"

    print("KERNEL_OK")
</pallas_src>

<mosaic_0001>
module attributes {stable_mosaic.version = 11 : i64} {
  func.func @_stb_fused_kernel(%arg0: memref<1x4xf32, #tpu.memory_space<vmem>>, %arg1: memref<18x4xf32, #tpu.memory_space<vmem>>, %arg2: memref<4x4xf32, #tpu.memory_space<vmem>>) attributes {dimension_semantics = [], scalar_prefetch = 0 : i64, scratch_operands = 0 : i64, tpu.core_type = #tpu.core_type<tc>} {
    %c0 = arith.constant 0 : index
    %c0_0 = arith.constant 0 : index
    %0 = vector.load %arg0[%c0, %c0_0] : memref<1x4xf32, #tpu.memory_space<vmem>>, vector<1x4xf32>
    %c0_1 = arith.constant 0 : index
    %c0_2 = arith.constant 0 : index
    %1 = vector.load %arg1[%c0_1, %c0_2] : memref<18x4xf32, #tpu.memory_space<vmem>>, vector<1x4xf32>
    %c1 = arith.constant 1 : index
    %c0_3 = arith.constant 0 : index
    %2 = vector.load %arg1[%c1, %c0_3] : memref<18x4xf32, #tpu.memory_space<vmem>>, vector<1x4xf32>
    %c2 = arith.constant 2 : index
    %c0_4 = arith.constant 0 : index
    %3 = vector.load %arg1[%c2, %c0_4] : memref<18x4xf32, #tpu.memory_space<vmem>>, vector<1x4xf32>
    %c3 = arith.constant 3 : index
    %c0_5 = arith.constant 0 : index
    %4 = vector.load %arg1[%c3, %c0_5] : memref<18x4xf32, #tpu.memory_space<vmem>>, vector<1x4xf32>
    %c4 = arith.constant 4 : index
    %c0_6 = arith.constant 0 : index
    %5 = vector.load %arg1[%c4, %c0_6] : memref<18x4xf32, #tpu.memory_space<vmem>>, vector<1x4xf32>
    %c5 = arith.constant 5 : index
    %c0_7 = arith.constant 0 : index
    %6 = vector.load %arg1[%c5, %c0_7] : memref<18x4xf32, #tpu.memory_space<vmem>>, vector<1x4xf32>
    %c12 = arith.constant 12 : index
    %c0_8 = arith.constant 0 : index
    %7 = vector.load %arg1[%c12, %c0_8] : memref<18x4xf32, #tpu.memory_space<vmem>>, vector<1x4xf32>
    %c13 = arith.constant 13 : index
    %c0_9 = arith.constant 0 : index
    %8 = vector.load %arg1[%c13, %c0_9] : memref<18x4xf32, #tpu.memory_space<vmem>>, vector<1x4xf32>
    %c14 = arith.constant 14 : index
    %c0_10 = arith.constant 0 : index
    %9 = vector.load %arg1[%c14, %c0_10] : memref<18x4xf32, #tpu.memory_space<vmem>>, vector<1x4xf32>
    %c15 = arith.constant 15 : index
    %c0_11 = arith.constant 0 : index
    %10 = vector.load %arg1[%c15, %c0_11] : memref<18x4xf32, #tpu.memory_space<vmem>>, vector<1x4xf32>
    %c16 = arith.constant 16 : index
    %c0_12 = arith.constant 0 : index
    %11 = vector.load %arg1[%c16, %c0_12] : memref<18x4xf32, #tpu.memory_space<vmem>>, vector<1x4xf32>
    %c17 = arith.constant 17 : index
    %c0_13 = arith.constant 0 : index
    %12 = vector.load %arg1[%c17, %c0_13] : memref<18x4xf32, #tpu.memory_space<vmem>>, vector<1x4xf32>
    %13 = arith.addf %0, %5 : vector<1x4xf32>
    %14 = vector.extract_strided_slice %0 {offsets = [0, 0], sizes = [1, 1], strides = [1, 1]} : vector<1x4xf32> to vector<1x1xf32>
    %15 = vector.broadcast %14 : vector<1x1xf32> to vector<1x4xf32>
    %16 = arith.mulf %15, %1 : vector<1x4xf32>
    %17 = arith.addf %13, %16 : vector<1x4xf32>
    %18 = vector.extract_strided_slice %0 {offsets = [0, 1], sizes = [1, 1], strides = [1, 1]} : vector<1x4xf32> to vector<1x1xf32>
    %19 = vector.broadcast %18 : vector<1x1xf32> to vector<1x4xf32>
    %20 = arith.mulf %19, %2 : vector<1x4xf32>
    %21 = arith.addf %17, %20 : vector<1x4xf32>
    %22 = arith.addf %0, %6 : vector<1x4xf32>
    %23 = vector.extract_strided_slice %0 {offsets = [0, 0], sizes = [1, 1], strides = [1, 1]} : vector<1x4xf32> to vector<1x1xf32>
    %24 = vector.broadcast %23 : vector<1x1xf32> to vector<1x4xf32>
    %25 = arith.mulf %24, %3 : vector<1x4xf32>
    %26 = arith.addf %22, %25 : vector<1x4xf32>
    %27 = vector.extract_strided_slice %0 {offsets = [0, 1], sizes = [1, 1], strides = [1, 1]} : vector<1x4xf32> to vector<1x1xf32>
    %28 = vector.broadcast %27 : vector<1x1xf32> to vector<1x4xf32>
    %29 = arith.mulf %28, %4 : vector<1x4xf32>
    %30 = arith.addf %26, %29 : vector<1x4xf32>
    %31 = arith.addf %0, %5 : vector<1x4xf32>
    %32 = vector.extract_strided_slice %0 {offsets = [0, 2], sizes = [1, 1], strides = [1, 1]} : vector<1x4xf32> to vector<1x1xf32>
    %33 = vector.broadcast %32 : vector<1x1xf32> to vector<1x4xf32>
    %34 = arith.mulf %33, %1 : vector<1x4xf32>
    %35 = arith.addf %31, %34 : vector<1x4xf32>
    %36 = vector.extract_strided_slice %0 {offsets = [0, 3], sizes = [1, 1], strides = [1, 1]} : vector<1x4xf32> to vector<1x1xf32>
    %37 = vector.broadcast %36 : vector<1x1xf32> to vector<1x4xf32>
    %38 = arith.mulf %37, %2 : vector<1x4xf32>
    %39 = arith.addf %35, %38 : vector<1x4xf32>
    %40 = arith.addf %0, %6 : vector<1x4xf32>
    %41 = vector.extract_strided_slice %0 {offsets = [0, 2], sizes = [1, 1], strides = [1, 1]} : vector<1x4xf32> to vector<1x1xf32>
    %42 = vector.broadcast %41 : vector<1x1xf32> to vector<1x4xf32>
    %43 = arith.mulf %42, %3 : vector<1x4xf32>
    %44 = arith.addf %40, %43 : vector<1x4xf32>
    %45 = vector.extract_strided_slice %0 {offsets = [0, 3], sizes = [1, 1], strides = [1, 1]} : vector<1x4xf32> to vector<1x1xf32>
    %46 = vector.broadcast %45 : vector<1x1xf32> to vector<1x4xf32>
    %47 = arith.mulf %46, %4 : vector<1x4xf32>
    %48 = arith.addf %44, %47 : vector<1x4xf32>
    %49 = tpu.concatenate %21, %30, %39, %48 in 0 : vector<1x4xf32>, vector<1x4xf32>, vector<1x4xf32>, vector<1x4xf32> -> vector<4x4xf32>
    %cst = arith.constant dense<0.000000e+00> : vector<4xf32>
    %50 = vector.multi_reduction <add>, %49, %cst [1] : vector<4x4xf32> to vector<4xf32>
    %51 = vector.shape_cast %50 : vector<4xf32> to vector<4x1xf32>
    %cst_14 = arith.constant 4.000000e+00 : f32
    %52 = vector.broadcast %cst_14 : f32 to vector<4x1xf32>
    %53 = arith.divf %51, %52 : vector<4x1xf32>
    %54 = vector.broadcast %53 : vector<4x1xf32> to vector<4x4xf32>
    %55 = arith.subf %49, %54 : vector<4x4xf32>
    %56 = arith.mulf %55, %55 : vector<4x4xf32>
    %cst_15 = arith.constant dense<0.000000e+00> : vector<4xf32>
    %57 = vector.multi_reduction <add>, %56, %cst_15 [1] : vector<4x4xf32> to vector<4xf32>
    %58 = vector.shape_cast %57 : vector<4xf32> to vector<4x1xf32>
    %cst_16 = arith.constant 4.000000e+00 : f32
    %59 = vector.broadcast %cst_16 : f32 to vector<4x1xf32>
    %60 = arith.divf %58, %59 : vector<4x1xf32>
    %61 = vector.broadcast %53 : vector<4x1xf32> to vector<4x4xf32>
    %62 = arith.subf %49, %61 : vector<4x4xf32>
    %cst_17 = arith.constant 9.99999974E-6 : f32
    %63 = vector.broadcast %cst_17 : f32 to vector<4x1xf32>
    %64 = arith.addf %60, %63 : vector<4x1xf32>
    %65 = math.rsqrt %64 : vector<4x1xf32>
    %66 = vector.broadcast %65 : vector<4x1xf32> to vector<4x4xf32>
    %67 = arith.mulf %62, %66 : vector<4x4xf32>
    %68 = vector.broadcast %7 : vector<1x4xf32> to vector<4x4xf32>
    %69 = arith.mulf %67, %68 : vector<4x4xf32>
    %70 = vector.broadcast %8 : vector<1x4xf32> to vector<4x4xf32>
    %71 = arith.addf %69, %70 : vector<4x4xf32>
    %72 = vector.extract_strided_slice %71 {offsets = [0, 0], sizes = [4, 1], strides = [1, 1]} : vector<4x4xf32> to vector<4x1xf32>
    %c6 = arith.constant 6 : index
    %c0_18 = arith.constant 0 : index
    %73 = vector.load %arg1[%c6, %c0_18] : memref<18x4xf32, #tpu.memory_space<vmem>>, vector<1x4xf32>
    %74 = vector.broadcast %72 : vector<4x1xf32> to vector<4x4xf32>
    %75 = vector.broadcast %73 : vector<1x4xf32> to vector<4x4xf32>
    %76 = arith.mulf %74, %75 : vector<4x4xf32>
    %77 = vector.broadcast %9 : vector<1x4xf32> to vector<4x4xf32>
    %78 = arith.addf %77, %76 : vector<4x4xf32>
    %79 = vector.extract_strided_slice %71 {offsets = [0, 1], sizes = [4, 1], strides = [1, 1]} : vector<4x4xf32> to vector<4x1xf32>
    %c7 = arith.constant 7 : index
    %c0_19 = arith.constant 0 : index
    %80 = vector.load %arg1[%c7, %c0_19] : memref<18x4xf32, #tpu.memory_space<vmem>>, vector<1x4xf32>
    %81 = vector.broadcast %79 : vector<4x1xf32> to vector<4x4xf32>
    %82 = vector.broadcast %80 : vector<1x4xf32> to vector<4x4xf32>
    %83 = arith.mulf %81, %82 : vector<4x4xf32>
    %84 = arith.addf %78, %83 : vector<4x4xf32>
    %85 = vector.extract_strided_slice %71 {offsets = [0, 2], sizes = [4, 1], strides = [1, 1]} : vector<4x4xf32> to vector<4x1xf32>
    %c8 = arith.constant 8 : index
    %c0_20 = arith.constant 0 : index
    %86 = vector.load %arg1[%c8, %c0_20] : memref<18x4xf32, #tpu.memory_space<vmem>>, vector<1x4xf32>
    %87 = vector.broadcast %85 : vector<4x1xf32> to vector<4x4xf32>
    %88 = vector.broadcast %86 : vector<1x4xf32> to vector<4x4xf32>
    %89 = arith.mulf %87, %88 : vector<4x4xf32>
    %90 = arith.addf %84, %89 : vector<4x4xf32>
    %91 = vector.extract_strided_slice %71 {offsets = [0, 3], sizes = [4, 1], strides = [1, 1]} : vector<4x4xf32> to vector<4x1xf32>
    %c9 = arith.constant 9 : index
    %c0_21 = arith.constant 0 : index
    %92 = vector.load %arg1[%c9, %c0_21] : memref<18x4xf32, #tpu.memory_space<vmem>>, vector<1x4xf32>
    %93 = vector.broadcast %91 : vector<4x1xf32> to vector<4x4xf32>
    %94 = vector.broadcast %92 : vector<1x4xf32> to vector<4x4xf32>
    %95 = arith.mulf %93, %94 : vector<4x4xf32>
    %96 = arith.addf %90, %95 : vector<4x4xf32>
    %cst_22 = arith.constant 5.000000e-01 : f32
    %97 = vector.broadcast %cst_22 : f32 to vector<4x4xf32>
    %98 = arith.mulf %97, %96 : vector<4x4xf32>
    %cst_23 = arith.constant 0.707106769 : f32
    %99 = vector.broadcast %cst_23 : f32 to vector<4x4xf32>
    %100 = arith.mulf %96, %99 : vector<4x4xf32>
    %cst_24 = arith.constant 0.000000e+00 : f32
    %101 = vector.broadcast %cst_24 : f32 to vector<4x4xf32>
    %102 = arith.cmpf oge, %100, %101 : vector<4x4xf32>
    %cst_25 = arith.constant 1.000000e+00 : f32
    %cst_26 = arith.constant -1.000000e+00 : f32
    %103 = vector.broadcast %cst_25 : f32 to vector<4x4xf32>
    %104 = vector.broadcast %cst_26 : f32 to vector<4x4xf32>
    %105 = arith.select %102, %103, %104 : vector<4x4xi1>, vector<4x4xf32>
    %106 = math.absf %100 : vector<4x4xf32>
    %cst_27 = arith.constant 0.327591091 : f32
    %107 = vector.broadcast %cst_27 : f32 to vector<4x4xf32>
    %108 = arith.mulf %107, %106 : vector<4x4xf32>
    %cst_28 = arith.constant 1.000000e+00 : f32
    %109 = vector.broadcast %cst_28 : f32 to vector<4x4xf32>
    %110 = arith.addf %109, %108 : vector<4x4xf32>
    %cst_29 = arith.constant 1.000000e+00 : f32
    %111 = vector.broadcast %cst_29 : f32 to vector<4x4xf32>
    %112 = arith.divf %111, %110 : vector<4x4xf32>
    %cst_30 = arith.constant 1.06140542 : f32
    %113 = vector.broadcast %cst_30 : f32 to vector<4x4xf32>
    %114 = arith.mulf %113, %112 : vector<4x4xf32>
    %cst_31 = arith.constant -1.45315206 : f32
    %115 = vector.broadcast %cst_31 : f32 to vector<4x4xf32>
    %116 = arith.addf %114, %115 : vector<4x4xf32>
    %117 = arith.mulf %116, %112 : vector<4x4xf32>
    %cst_32 = arith.constant 1.42141378 : f32
    %118 = vector.broadcast %cst_32 : f32 to vector<4x4xf32>
    %119 = arith.addf %117, %118 : vector<4x4xf32>
    %120 = arith.mulf %119, %112 : vector<4x4xf32>
    %cst_33 = arith.constant -0.284496725 : f32
    %121 = vector.broadcast %cst_33 : f32 to vector<4x4xf32>
    %122 = arith.addf %120, %121 : vector<4x4xf32>
    %123 = arith.mulf %122, %112 : vector<4x4xf32>
    %cst_34 = arith.constant 0.254829586 : f32
    %124 = vector.broadcast %cst_34 : f32 to vector<4x4xf32>
    %125 = arith.addf %123, %124 : vector<4x4xf32>
    %126 = arith.mulf %125, %112 : vector<4x4xf32>
    %cst_35 = arith.constant 0.000000e+00 : f32
    %127 = vector.broadcast %cst_35 : f32 to vector<4x4xf32>
    %128 = arith.subf %127, %106 : vector<4x4xf32>
    %129 = arith.mulf %128, %106 : vector<4x4xf32>
    %130 = math.exp %129 : vector<4x4xf32>
    %131 = arith.mulf %126, %130 : vector<4x4xf32>
    %cst_36 = arith.constant 1.000000e+00 : f32
    %132 = vector.broadcast %cst_36 : f32 to vector<4x4xf32>
    %133 = arith.subf %132, %131 : vector<4x4xf32>
    %134 = arith.mulf %105, %133 : vector<4x4xf32>
    %cst_37 = arith.constant 1.000000e+00 : f32
    %135 = vector.broadcast %cst_37 : f32 to vector<4x4xf32>
    %136 = arith.addf %135, %134 : vector<4x4xf32>
    %137 = arith.mulf %98, %136 : vector<4x4xf32>
    %138 = vector.extract_strided_slice %137 {offsets = [0, 0], sizes = [4, 1], strides = [1, 1]} : vector<4x4xf32> to vector<4x1xf32>
    %c10 = arith.constant 10 : index
    %c0_38 = arith.constant 0 : index
    %139 = vector.load %arg1[%c10, %c0_38] : memref<18x4xf32, #tpu.memory_space<vmem>>, vector<1x4xf32>
    %140 = vector.broadcast %138 : vector<4x1xf32> to vector<4x4xf32>
    %141 = vector.broadcast %139 : vector<1x4xf32> to vector<4x4xf32>
    %142 = arith.mulf %140, %141 : vector<4x4xf32>
    %143 = vector.broadcast %10 : vector<1x4xf32> to vector<4x4xf32>
    %144 = arith.addf %143, %142 : vector<4x4xf32>
    %145 = vector.extract_strided_slice %137 {offsets = [0, 1], sizes = [4, 1], strides = [1, 1]} : vector<4x4xf32> to vector<4x1xf32>
    %c11 = arith.constant 11 : index
    %c0_39 = arith.constant 0 : index
    %146 = vector.load %arg1[%c11, %c0_39] : memref<18x4xf32, #tpu.memory_space<vmem>>, vector<1x4xf32>
    %147 = vector.broadcast %145 : vector<4x1xf32> to vector<4x4xf32>
    %148 = vector.broadcast %146 : vector<1x4xf32> to vector<4x4xf32>
    %149 = arith.mulf %147, %148 : vector<4x4xf32>
    %150 = arith.addf %144, %149 : vector<4x4xf32>
    %151 = arith.addf %71, %150 : vector<4x4xf32>
    %cst_40 = arith.constant dense<0.000000e+00> : vector<4xf32>
    %152 = vector.multi_reduction <add>, %151, %cst_40 [1] : vector<4x4xf32> to vector<4xf32>
    %153 = vector.shape_cast %152 : vector<4xf32> to vector<4x1xf32>
    %cst_41 = arith.constant 4.000000e+00 : f32
    %154 = vector.broadcast %cst_41 : f32 to vector<4x1xf32>
    %155 = arith.divf %153, %154 : vector<4x1xf32>
    %156 = vector.broadcast %155 : vector<4x1xf32> to vector<4x4xf32>
    %157 = arith.subf %151, %156 : vector<4x4xf32>
    %158 = arith.mulf %157, %157 : vector<4x4xf32>
    %cst_42 = arith.constant dense<0.000000e+00> : vector<4xf32>
    %159 = vector.multi_reduction <add>, %158, %cst_42 [1] : vector<4x4xf32> to vector<4xf32>
    %160 = vector.shape_cast %159 : vector<4xf32> to vector<4x1xf32>
    %cst_43 = arith.constant 4.000000e+00 : f32
    %161 = vector.broadcast %cst_43 : f32 to vector<4x1xf32>
    %162 = arith.divf %160, %161 : vector<4x1xf32>
    %163 = vector.broadcast %155 : vector<4x1xf32> to vector<4x4xf32>
    %164 = arith.subf %151, %163 : vector<4x4xf32>
    %cst_44 = arith.constant 9.99999974E-6 : f32
    %165 = vector.broadcast %cst_44 : f32 to vector<4x1xf32>
    %166 = arith.addf %162, %165 : vector<4x1xf32>
    %167 = math.rsqrt %166 : vector<4x1xf32>
    %168 = vector.broadcast %167 : vector<4x1xf32> to vector<4x4xf32>
    %169 = arith.mulf %164, %168 : vector<4x4xf32>
    %170 = vector.broadcast %11 : vector<1x4xf32> to vector<4x4xf32>
    %171 = arith.mulf %169, %170 : vector<4x4xf32>
    %172 = vector.broadcast %12 : vector<1x4xf32> to vector<4x4xf32>
    %173 = arith.addf %171, %172 : vector<4x4xf32>
    %c0_45 = arith.constant 0 : index
    %c0_46 = arith.constant 0 : index
    %174 = vector.load %arg2[%c0_45, %c0_46] : memref<4x4xf32, #tpu.memory_space<vmem>>, vector<4x4xf32>
    tpu.vector_store %arg2[%c0_45, %c0_46], %173 {strides = array<i32>} : memref<4x4xf32, #tpu.memory_space<vmem>>, vector<4x4xf32>,
    return
  }
}

</mosaic_0001>

<llo_original>
// kernel: stb_forward.1
$region0: #{stb_forward.1}
  #allocation0 [shape = 'u32[]', space=smem, size = 0x4, offset = 0x4, fixed_abs, tag = 'smem constant byte address 0x4 - core index']
  #allocation1 [shape = 'u32[144,128]{1,0:T(1,128)}', space=vmem, size = 0x12000, scoped, tag = 'internal scratch']
  %s0 = inlined_call_operand.vmem [shape: f32[1,4], index: 0, kind: input, shape index: {}]
  %s1 = inlined_call_operand.vmem [shape: f32[18,4], index: 1, kind: input, shape index: {}]
  %s2 = inlined_call_operand.vmem [shape: f32[4,4], index: 2, kind: output, shape index: {}]
  %s3 = sld [smem:[#allocation0]]
  $region18: #{stb_forward.1} parent=0
    _
  %s5 = ssub.s32 1, %s3
  %s6 = scalar_select 0, %s5, %s3
  // Predicated region
  $region2: #{stb_forward.1} parent=0 // pred_check
    _
  $region3: #{stb_forward.1} parent=0 // pred_check_branch
    %8 = sbr.rel (0) target = $region5
  $region4: #{stb_forward.1} parent=0 // pred_region
    _
  $region5: #{stb_forward.1} parent=0 // pred_fallthru
    _
  // Predicated region
  $region6: #{stb_forward.1} parent=0 // pred_check
    _
  $region7: #{stb_forward.1} parent=0 // pred_check_branch
    %10 = sbr.rel (0) target = $region9
  $region8: #{stb_forward.1} parent=0 // pred_region
    _
  $region9: #{stb_forward.1} parent=0 // pred_fallthru
    _
  %v11 = vld [vmem:[%s0] sm:$0x1]
  %v12 = vld [vmem:[%s1] sm:$0x1]
  %v13 = vld [vmem:[%s1 + $0x1] sm:$0x1]
  %v14 = vld [vmem:[%s1 + $0x2] sm:$0x1]
  %v15 = vld [vmem:[%s1 + $0x3] sm:$0x1]
  %v16 = vld [vmem:[%s1 + $0x4] sm:$0x1]
  %v17 = vld [vmem:[%s1 + $0x5] sm:$0x1]
  %v18 = vld [vmem:[%s1 + $0xc] sm:$0x1]
  %v19 = vld [vmem:[%s1 + $0xd] sm:$0x1]
  %v20 = vld [vmem:[%s1 + $0xe] sm:$0x1]
  %v21 = vld [vmem:[%s1 + $0xf] sm:$0x1]
  %v22 = vld [vmem:[%s1 + $0x10] sm:$0x1]
  %v23 = vld [vmem:[%s1 + $0x11] sm:$0x1]
  %v24 = vadd.f32 %v11, %v16
  %26 = vset.pattern.permute.xlu0 0
  %27 = vperm.xlu0 %26, %v11
  %v28 = vpop.permute.xlu0 %27
  %v30 = vlaneseq
  %v31 = vshrl.u32 %v30, 7
  %v32 = vsub.s32 0, %v31
  %v33 = vrot.slane %v28, %v32
  %v34 = vmul.f32 %v33, %v12
  %v35 = vadd.f32 %v24, %v34
  %36 = vset.pattern.permute.xlu0 1
  %37 = vperm.xlu0 %36, %v11
  %v38 = vpop.permute.xlu0 %37
  %v40 = vlaneseq
  %v41 = vshrl.u32 %v40, 7
  %v42 = vsub.s32 0, %v41
  %v43 = vrot.slane %v38, %v42
  %v44 = vmul.f32 %v43, %v13
  %v45 = vadd.f32 %v35, %v44
  %v46 = vadd.f32 %v11, %v17
  %v47 = vmul.f32 %v33, %v14
  %v48 = vadd.f32 %v46, %v47
  %v49 = vmul.f32 %v43, %v15
  %v50 = vadd.f32 %v48, %v49
  %51 = vset.pattern.permute.xlu0 2
  %52 = vperm.xlu0 %51, %v11
  %v53 = vpop.permute.xlu0 %52
  %v55 = vlaneseq
  %v56 = vshrl.u32 %v55, 7
  %v57 = vsub.s32 0, %v56
  %v58 = vrot.slane %v53, %v57
  %v59 = vmul.f32 %v58, %v12
  %v60 = vadd.f32 %v24, %v59
  %61 = vset.pattern.permute.xlu0 3
  %62 = vperm.xlu0 %61, %v11
  %v63 = vpop.permute.xlu0 %62
  %v65 = vlaneseq
  %v66 = vshrl.u32 %v65, 7
  %v67 = vsub.s32 0, %v66
  %v68 = vrot.slane %v63, %v67
  %v69 = vmul.f32 %v68, %v13
  %v70 = vadd.f32 %v60, %v69
  %v71 = vmul.f32 %v58, %v14
  %v72 = vadd.f32 %v46, %v71
  %v73 = vmul.f32 %v68, %v15
  %v74 = vadd.f32 %v72, %v73
  %v76 = vlaneseq
  %v77 = vshrl.u32 %v76, 7
  %v78 = vsub.s32 0, %v77
  %v79 = vrot.slane %v50, %v78
  %v82 = vlaneseq
  %v83 = vshrl.u32 %v82, 7
  %v84 = vsub.s32 0, %v83
  %v85 = vrot.slane %v70, %v84
  %v88 = vlaneseq
  %v89 = vshrl.u32 %v88, 7
  %v90 = vsub.s32 0, %v89
  %v91 = vrot.slane %v74, %v90
  %vm93 = vcmask 1040384
  %v94 = vsel %vm93, %v45, %v79
  %vm95 = vcmask 1041408
  %v96 = vsel %vm95, %v94, %v85
  %vm97 = vcmask 1042432
  %v98 = vsel %vm97, %v96, %v91
  %vm99 = vcmask 27648
  %v100 = vsel %vm99, %v98, 0.0
  %101 = vadd.xlane.f32.xlu0 %v100
  %v102 = vpop.xlane.xlu0 %101
  %v103 = vrcp.pop 4.0
  %v104 = vmul.f32 %v102, %v103
  %v105 = vsub.f32 %v98, %v104
  %v106 = vmul.f32 %v105, %v105
  %v107 = vsel %vm99, %v106, 0.0
  %108 = vadd.xlane.f32.xlu0 %v107
  %v109 = vpop.xlane.xlu0 %108
  %v110 = vmul.f32 %v109, %v103
  %v111 = vadd.f32 %v110, 1e-05
  %v112 = vrsqrt.pop %v111
  %v113 = vmul.f32 %v105, %v112
  %v114 = vlaneseq
  %v115 = vshrl.u32 %v114, 7
  %v116 = vsub.s32 0, %v115
  %v117 = vrot.slane %v18, %v116
  %v118 = vmul.f32 %v113, %v117
  %v119 = vlaneseq
  %v120 = vshrl.u32 %v119, 7
  %v121 = vsub.s32 0, %v120
  %v122 = vrot.slane %v19, %v121
  %v123 = vadd.f32 %v118, %v122
  %v124 = vld [vmem:[%s1 + $0x6] sm:$0x1]
  %126 = vset.pattern.permute.xlu0 0
  %127 = vperm.xlu0 %126, %v123
  %v128 = vpop.permute.xlu0 %127
  %v130 = vlaneseq
  %v131 = vshrl.u32 %v130, 7
  %v132 = vsub.s32 0, %v131
  %v133 = vrot.slane %v124, %v132
  %v134 = vmul.f32 %v128, %v133
  %v135 = vlaneseq
  %v136 = vshrl.u32 %v135, 7
  %v137 = vsub.s32 0, %v136
  %v138 = vrot.slane %v20, %v137
  %v139 = vadd.f32 %v138, %v134
  %v140 = vld [vmem:[%s1 + $0x7] sm:$0x1]
  %141 = vset.pattern.permute.xlu0 1
  %142 = vperm.xlu0 %141, %v123
  %v143 = vpop.permute.xlu0 %142
  %v145 = vlaneseq
  %v146 = vshrl.u32 %v145, 7
  %v147 = vsub.s32 0, %v146
  %v148 = vrot.slane %v140, %v147
  %v149 = vmul.f32 %v143, %v148
  %v150 = vadd.f32 %v139, %v149
  %v151 = vld [vmem:[%s1 + $0x8] sm:$0x1]
  %152 = vset.pattern.permute.xlu0 2
  %153 = vperm.xlu0 %152, %v123
  %v154 = vpop.permute.xlu0 %153
  %v156 = vlaneseq
  %v157 = vshrl.u32 %v156, 7
  %v158 = vsub.s32 0, %v157
  %v159 = vrot.slane %v151, %v158
  %v160 = vmul.f32 %v154, %v159
  %v161 = vadd.f32 %v150, %v160
  %v162 = vld [vmem:[%s1 + $0x9] sm:$0x1]
  %163 = vset.pattern.permute.xlu0 3
  %164 = vperm.xlu0 %163, %v123
  %v165 = vpop.permute.xlu0 %164
  %v167 = vlaneseq
  %v168 = vshrl.u32 %v167, 7
  %v169 = vsub.s32 0, %v168
  %v170 = vrot.slane %v162, %v169
  %v171 = vmul.f32 %v165, %v170
  %v172 = vadd.f32 %v161, %v171
  %v173 = vmul.f32 %v172, 0.5
  %v174 = vmul.f32 %v172, 0.70710677
  %vm175 = vcmp.ge.f32.partialorder %v174, 0.0
  %v176 = vsel %vm175, 1.0, -1.0
  %v177 = vand.u32 2147483647, %v174
  %v178 = vmul.f32 %v177, 0.3275911
  %v179 = vadd.f32 %v178, 1.0
  %v180 = vrcp.pop %v179
  %v181 = vmul.f32 1.0, %v180
  %v182 = vmul.f32 %v181, 1.0614054
  %v183 = vadd.f32 %v182, -1.4531521
  %v184 = vmul.f32 %v183, %v181
  %v185 = vadd.f32 %v184, 1.4214138
  %v186 = vmul.f32 %v185, %v181
  %v187 = vadd.f32 %v186, -0.28449672
  %v188 = vmul.f32 %v187, %v181
  %v189 = vadd.f32 %v188, 0.2548296
  %v190 = vmul.f32 %v189, %v181
  %v191 = vsub.f32 0.0, %v177
  %v192 = vmul.f32 %v191, %v177
  %v193 = vmul.f32 %v192, 1.442695
  %v194 = vpow.pop %v193
  %v195 = vmul.f32 %v190, %v194
  %v196 = vsub.f32 1.0, %v195
  %v197 = vmul.f32 %v176, %v196
  %v198 = vadd.f32 %v197, 1.0
  %v199 = vmul.f32 %v173, %v198
  %v200 = vld [vmem:[%s1 + $0xa] sm:$0x1]
  %202 = vset.pattern.permute.xlu0 0
  %203 = vperm.xlu0 %202, %v199
  %v204 = vpop.permute.xlu0 %203
  %v206 = vlaneseq
  %v207 = vshrl.u32 %v206, 7
  %v208 = vsub.s32 0, %v207
  %v209 = vrot.slane %v200, %v208
  %v210 = vmul.f32 %v204, %v209
  %v211 = vlaneseq
  %v212 = vshrl.u32 %v211, 7
  %v213 = vsub.s32 0, %v212
  %v214 = vrot.slane %v21, %v213
  %v215 = vadd.f32 %v214, %v210
  %v216 = vld [vmem:[%s1 + $0xb] sm:$0x1]
  %217 = vset.pattern.permute.xlu0 1
  %218 = vperm.xlu0 %217, %v199
  %v219 = vpop.permute.xlu0 %218
  %v221 = vlaneseq
  %v222 = vshrl.u32 %v221, 7
  %v223 = vsub.s32 0, %v222
  %v224 = vrot.slane %v216, %v223
  %v225 = vmul.f32 %v219, %v224
  %v226 = vadd.f32 %v215, %v225
  %v227 = vadd.f32 %v123, %v226
  %v228 = vsel %vm99, %v227, 0.0
  %229 = vadd.xlane.f32.xlu0 %v228
  %v230 = vpop.xlane.xlu0 %229
  %v231 = vmul.f32 %v230, %v103
  %v232 = vsub.f32 %v227, %v231
  %v233 = vmul.f32 %v232, %v232
  %v234 = vsel %vm99, %v233, 0.0
  %235 = vadd.xlane.f32.xlu0 %v234
  %v236 = vpop.xlane.xlu0 %235
  %v237 = vmul.f32 %v236, %v103
  %v238 = vadd.f32 %v237, 1e-05
  %v239 = vrsqrt.pop %v238
  %v240 = vmul.f32 %v232, %v239
  %v241 = vlaneseq
  %v242 = vshrl.u32 %v241, 7
  %v243 = vsub.s32 0, %v242
  %v244 = vrot.slane %v22, %v243
  %v245 = vmul.f32 %v240, %v244
  %v246 = vlaneseq
  %v247 = vshrl.u32 %v246, 7
  %v248 = vsub.s32 0, %v247
  %v249 = vrot.slane %v23, %v248
  %v250 = vadd.f32 %v245, %v249
  %251 = vst.msk [vmem:[%s2] sm:$0xf] %vm99, %v250
  // Predicated region
  $region10: #{stb_forward.1} parent=0 // pred_check
    _
  $region11: #{stb_forward.1} parent=0 // pred_check_branch
    %253 = sbr.rel (0) target = $region13
  $region12: #{stb_forward.1} parent=0 // pred_region
    _
  $region13: #{stb_forward.1} parent=0 // pred_fallthru
    _
  // Predicated region
  $region14: #{stb_forward.1} parent=0 // pred_check
    _
  $region15: #{stb_forward.1} parent=0 // pred_check_branch
    %255 = sbr.rel (0) target = $region17
  $region16: #{stb_forward.1} parent=0 // pred_region
    _
  $region17: #{stb_forward.1} parent=0 // pred_fallthru
    _

</llo_original>
